<compile_context>
chip_gen: v7x
topology: tpu7x:2x2x1
jax: 0.10.0
libtpu: 0.0.40
codegen_flags: <defaults>
</compile_context>

<pallas_src>
import functools
import math

import jax
import jax.numpy as jnp
from jax import lax
from jax.experimental import pallas as pl
from jax.experimental.pallas import tpu as pltpu


def _round_up(x, m):
    return (x + m - 1) // m * m


# ------------------------------ Pallas kernel ------------------------------ #
def _patch_embed_kernel(xm_ref, xh_ref, w_ref, b_ref, o_ref, *, kh, stride, rows, wout):
    # xm_ref: (1, rows, stride, Wout, KC)  main band of W-expanded input row-groups (bf16)
    # xh_ref: (1, halo, stride, Wout, KC)  halo row-groups shared with the next band (bf16)
    # w_ref : (kh*KC, E)                   projection weight (bf16, resident)
    # b_ref : (1, E)                       bias (f32, resident)
    # o_ref : (1, rows*Wout, E)            output tile (f32)
    band = jnp.concatenate([xm_ref[0], xh_ref[0]], axis=0)   # (rows+halo, stride, Wout, KC)

    # In-VMEM im2col: the H-direction gather is pure major-dim slicing (no lane/sublane
    # shuffles); only the final K-concat places the KC-wide chunks along the lane dim.
    pieces = [band[di // stride: di // stride + rows, di % stride] for di in range(kh)]
    patches = jnp.concatenate(pieces, axis=-1)               # (rows, Wout, kh*KC)

    w = w_ref[...]
    bias = b_ref[...]                                        # f32 epilogue (v5e-friendly)
    for r in range(rows):                                    # static unroll: 1 MXU dot / row
        acc = jnp.dot(patches[r], w, preferred_element_type=jnp.float32)   # (Wout, E)
        o_ref[0, pl.ds(r * wout, wout), :] = (acc + bias).astype(o_ref.dtype)


# ------------------------- tile / VMEM-limit selection ---------------------- #
def _pick_rows(batch, hout, wout, embed, kc, kh, stride, halo, in_itemsize, out_itemsize):
    """Output rows per grid step + a VMEM limit sized from the tile and the chip."""
    sub = 8 if out_itemsize >= 4 else 16             # output sublane tile
    lane_u = sub // math.gcd(wout, sub)              # keep rows*wout % sub == 0
    unit = halo * lane_u // math.gcd(halo, lane_u)   # lcm(halo, lane_u)

    try:
        cap = pltpu.get_tpu_info().vmem_capacity_bytes
    except Exception:                                # fallback: v7x per-core physical floor
        cap = 64 * 1024 * 1024
    budget = max(int(0.75 * cap), 32 * 1024 * 1024)

    def vmem_need(r):
        band = r * stride * wout * kc * in_itemsize
        hal = halo * stride * wout * kc * in_itemsize
        outb = r * wout * embed * out_itemsize
        inter = 2 * r * wout * kh * kc * in_itemsize + wout * embed * 4
        return 2 * (band + hal + outb) + kh * kc * embed * in_itemsize + embed * 4 + inter

    rows = max(min(_round_up(8, unit), _round_up(hout, unit)), unit)
    # grow towards ~2048-row output tiles while VMEM / Hout / unroll budget allow
    while (rows * wout < 2048 and 2 * rows <= _round_up(hout, unit)
           and 2 * rows <= 64 and vmem_need(2 * rows) <= budget):
        rows *= 2
    # shrink if the double-buffered tile would not fit this generation's VMEM
    while rows > unit and vmem_need(rows) > budget:
        rows -= unit
    # make sure small-batch inputs still give >=2 grid steps (v7x megacore)
    while rows > unit and batch * ((hout + rows - 1) // rows) < 2:
        rows -= unit

    vmem_limit = int(min(budget, max(2 * vmem_need(rows), 32 * 1024 * 1024)))
    return rows, vmem_limit


# ------------------------------- pallas_call -------------------------------- #
def _pallas_patch_embed(xw, w_mat, b_row, *, kh, stride, rows, hout, wout, halo,
                        out_dtype, vmem_limit):
    B, He2, s, Wout, KC = xw.shape
    K, E = w_mat.shape
    n_bands = pl.cdiv(hout, rows)

    kernel = functools.partial(_patch_embed_kernel, kh=kh, stride=stride,
                               rows=rows, wout=wout)

    band_bytes = rows * s * Wout * KC * xw.dtype.itemsize
    halo_bytes = halo * s * Wout * KC * xw.dtype.itemsize
    out_bytes = rows * Wout * E * jnp.dtype(out_dtype).itemsize
    cost = pl.CostEstimate(
        flops=2 * B * n_bands * rows * Wout * K * E,
        transcendentals=0,
        bytes_accessed=B * n_bands * (band_bytes + halo_bytes + out_bytes)
        + K * E * w_mat.dtype.itemsize + E * 4,
    )

    # Weight / bias never change across the grid -> single-buffer them to save VMEM.
    try:
        w_spec = pl.BlockSpec((K, E), lambda b, t: (0, 0), pipeline_mode=pl.Buffered(1))
        b_spec = pl.BlockSpec((1, E), lambda b, t: (0, 0), pipeline_mode=pl.Buffered(1))
    except (TypeError, AttributeError):              # older jax without pipeline_mode
        w_spec = pl.BlockSpec((K, E), lambda b, t: (0, 0))
        b_spec = pl.BlockSpec((1, E), lambda b, t: (0, 0))

    return pl.pallas_call(
        kernel,
        out_shape=jax.ShapeDtypeStruct((B, hout * wout, E), out_dtype),
        grid_spec=pltpu.PrefetchScalarGridSpec(
            num_scalar_prefetch=0,
            grid=(B, n_bands),
            in_specs=[
                # main band: R W-expanded row-groups (auto double-buffered)
                pl.BlockSpec((1, rows, s, Wout, KC), lambda b, t: (b, t, 0, 0, 0)),
                # halo: the (kh-1)//stride row-groups shared with the next band
                pl.BlockSpec((1, halo, s, Wout, KC),
                             lambda b, t: (b, t * (rows // halo) + rows // halo, 0, 0, 0)),
                w_spec,
                b_spec,
            ],
            out_specs=pl.BlockSpec((1, rows * wout, E), lambda b, t: (b, t, 0)),
        ),
        compiler_params=pltpu.CompilerParams(
            dimension_semantics=("parallel", "parallel"),
            vmem_limit_bytes=vmem_limit,
        ),
        cost_estimate=cost,
    )(xw, xw, w_mat, b_row)


# ------------------------------ glue / wrapper ------------------------------ #
def patch_embed_forward(x, weight, bias, *, patch_size=5, stride=2, pad=2,
                        flatten=True, compute_dtype=jnp.bfloat16, out_dtype=None):
    """x: (B, C, H, W) NCHW.  weight: (E, C, kh, kw) (PyTorch Conv2d).  bias: (E,).
    Returns (x_out, H, W); x_out is (B, Hout*Wout, E) when flatten (norm = Identity)."""
    B, C, H, W = x.shape
    E, Cw, kh, kw = weight.shape
    assert C == Cw and kh == patch_size and kw == patch_size
    assert kh > stride

    out_dtype = x.dtype if out_dtype is None else out_dtype
    Hout = (H + 2 * pad - kh) // stride + 1
    Wout = (W + 2 * pad - kw) // stride + 1
    KC = _round_up(kw * C, 8)            # per-kernel-row feature chunk: 15 -> 16 lanes
    K = kh * KC                          # contraction length (80) - no 128/256 padding
    halo = (kh - 1) // stride            # extra row-groups a band shares with the next

    rows, vmem_limit = _pick_rows(B, Hout, Wout, E, KC, kh, stride, halo,
                                  jnp.dtype(compute_dtype).itemsize,
                                  jnp.dtype(out_dtype).itemsize)
    n_bands = pl.cdiv(Hout, rows)
    He2 = n_bands * rows + halo          # row-groups the kernel will read (zero padded)
    Hp = He2 * stride                    # padded input height the wrapper must provide
    Wp = (Wout - 1) * stride + kw        # padded input width actually consumed

    # One cheap pass over the *un-expanded* input.
    x_nhwc = jnp.transpose(x, (0, 2, 3, 1))
    xp = jnp.pad(x_nhwc, ((0, 0), (pad, Hp - H - pad), (pad, Wp - W - pad), (0, 0)))

    # W-direction im2col (2.5x) fused with the bf16 cast and the KC zero pad:
    # xw[b, h, w, dj*C + c] = xp[b, h, w*stride + dj, c]
    cols = []
    for dj in range(kw):
        sl = lax.slice(xp, (0, 0, dj, 0),
                       (B, Hp, dj + stride * (Wout - 1) + 1, C),
                       (1, 1, stride, 1))
        cols.append(sl.astype(compute_dtype))
    if KC > kw * C:
        cols.append(jnp.zeros((B, Hp, Wout, KC - kw * C), compute_dtype))
    xw = jnp.concatenate(cols, axis=-1)             # (B, Hp, Wout, KC)
    xw = xw.reshape(B, He2, stride, Wout, KC)       # free reshape: split rows by parity

    # Weight (E, C, kh, kw) -> (kh, [kw, C] padded to KC, E) -> (K, E), matching the
    # patch feature order used by the kernel.  Zero rows contribute nothing.
    w_mat = jnp.transpose(weight, (2, 3, 1, 0)).reshape(kh, kw * C, E)
    w_mat = jnp.pad(w_mat, ((0, 0), (0, KC - kw * C), (0, 0)))
    w_mat = w_mat.reshape(K, E).astype(compute_dtype)
    b_row = bias.reshape(1, E).astype(jnp.float32)

    out = _pallas_patch_embed(xw, w_mat, b_row, kh=kh, stride=stride, rows=rows,
                              hout=Hout, wout=Wout, halo=halo,
                              out_dtype=out_dtype, vmem_limit=vmem_limit)
    # out == Conv2d(x).flatten(2).transpose(1, 2); norm_layer=None -> Identity.
    if not flatten:
        out = out.reshape(B, Hout, Wout, E).transpose(0, 3, 1, 2)
    return out, H, W


# ---------------------------------- main ------------------------------------ #
if __name__ == "__main__":
    key = jax.random.PRNGKey(0)
    B, C, H, W = 2, 3, 16, 16
    E, P, S, PAD = 32, 5, 2, 2

    kx, kw_, kb = jax.random.split(key, 3)
    x = jax.random.normal(kx, (B, C, H, W), dtype=jnp.float32)
    weight = jax.random.normal(kw_, (E, C, P, P), dtype=jnp.float32) * 0.05
    bias = jax.random.normal(kb, (E,), dtype=jnp.float32) * 0.05

    fwd = jax.jit(functools.partial(patch_embed_forward, patch_size=P, stride=S, pad=PAD))
    out, h, w = fwd(x, weight, bias)
    out = jax.block_until_ready(out)

    # Reference: fp32 lax conv (== nn.Conv2d), then flatten(2).transpose(1, 2).
    ref = lax.conv_general_dilated(
        x, weight, window_strides=(S, S), padding=((PAD, PAD), (PAD, PAD)),
        dimension_numbers=("NCHW", "OIHW", "NCHW"),
    ) + bias[None, :, None, None]
    ref = ref.reshape(B, E, -1).transpose(0, 2, 1)

    assert out.shape == ref.shape, (out.shape, ref.shape)
    # bf16 streaming of the MXU operands -> relaxed tolerance vs the fp32 reference.
    assert jnp.allclose(out, ref, atol=3e-2, rtol=3e-2), \
        float(jnp.max(jnp.abs(out - ref)))
    assert (int(h), int(w)) == (H, W)

    print("KERNEL_OK")
</pallas_src>

<mosaic_0001>
module attributes {stable_mosaic.version = 11 : i64} {
  func.func @_patch_embed_kernel(%arg0: i32, %arg1: i32, %arg2: memref<1x8x2x8x16xbf16, #tpu.memory_space<vmem>>, %arg3: memref<1x2x2x8x16xbf16, #tpu.memory_space<vmem>>, %arg4: memref<80x32xbf16, #tpu.memory_space<vmem>>, %arg5: memref<1x32xf32, #tpu.memory_space<vmem>>, %arg6: memref<1x64x32xf32, #tpu.memory_space<vmem>>) attributes {dimension_semantics = [#tpu.dimension_semantics<parallel>, #tpu.dimension_semantics<parallel>], iteration_bounds = array<i64: 2, 1>, scalar_prefetch = 0 : i64, scratch_operands = 0 : i64, tpu.core_type = #tpu.core_type<tc>, window_params = [{transform_indices = @transform_0, window_bounds = array<i64: 1, 8, 2, 8, 16>}, {transform_indices = @transform_1, window_bounds = array<i64: 1, 2, 2, 8, 16>}, {pipeline_mode = #tpu.pipeline_mode<synchronous>, transform_indices = @transform_2, window_bounds = array<i64: 80, 32>}, {pipeline_mode = #tpu.pipeline_mode<synchronous>, transform_indices = @transform_3, window_bounds = array<i64: 1, 32>}, {transform_indices = @transform_4, window_bounds = array<i64: 1, 64, 32>}]} {
    %c0 = arith.constant 0 : index
    %c0_0 = arith.constant 0 : index
    %c0_1 = arith.constant 0 : index
    %c0_2 = arith.constant 0 : index
    %c0_3 = arith.constant 0 : index
    %0 = vector.load %arg2[%c0, %c0_0, %c0_1, %c0_2, %c0_3] : memref<1x8x2x8x16xbf16, #tpu.memory_space<vmem>>, vector<1x8x2x8x16xbf16>
    %1 = vector.shape_cast %0 : vector<1x8x2x8x16xbf16> to vector<8x2x8x16xbf16>
    %c0_4 = arith.constant 0 : index
    %c0_5 = arith.constant 0 : index
    %c0_6 = arith.constant 0 : index
    %c0_7 = arith.constant 0 : index
    %c0_8 = arith.constant 0 : index
    %2 = vector.load %arg3[%c0_4, %c0_5, %c0_6, %c0_7, %c0_8] : memref<1x2x2x8x16xbf16, #tpu.memory_space<vmem>>, vector<1x2x2x8x16xbf16>
    %3 = vector.shape_cast %2 : vector<1x2x2x8x16xbf16> to vector<2x2x8x16xbf16>
    %4 = tpu.concatenate %1, %3 in 0 : vector<8x2x8x16xbf16>, vector<2x2x8x16xbf16> -> vector<10x2x8x16xbf16>
    %5 = vector.extract_strided_slice %4 {offsets = [0, 0, 0, 0], sizes = [8, 1, 8, 16], strides = [1, 1, 1, 1]} : vector<10x2x8x16xbf16> to vector<8x1x8x16xbf16>
    %6 = vector.shape_cast %5 : vector<8x1x8x16xbf16> to vector<8x8x16xbf16>
    %7 = vector.extract_strided_slice %4 {offsets = [0, 1, 0, 0], sizes = [8, 1, 8, 16], strides = [1, 1, 1, 1]} : vector<10x2x8x16xbf16> to vector<8x1x8x16xbf16>
    %8 = vector.shape_cast %7 : vector<8x1x8x16xbf16> to vector<8x8x16xbf16>
    %9 = vector.extract_strided_slice %4 {offsets = [1, 0, 0, 0], sizes = [8, 1, 8, 16], strides = [1, 1, 1, 1]} : vector<10x2x8x16xbf16> to vector<8x1x8x16xbf16>
    %10 = vector.shape_cast %9 : vector<8x1x8x16xbf16> to vector<8x8x16xbf16>
    %11 = vector.extract_strided_slice %4 {offsets = [1, 1, 0, 0], sizes = [8, 1, 8, 16], strides = [1, 1, 1, 1]} : vector<10x2x8x16xbf16> to vector<8x1x8x16xbf16>
    %12 = vector.shape_cast %11 : vector<8x1x8x16xbf16> to vector<8x8x16xbf16>
    %13 = vector.extract_strided_slice %4 {offsets = [2, 0, 0, 0], sizes = [8, 1, 8, 16], strides = [1, 1, 1, 1]} : vector<10x2x8x16xbf16> to vector<8x1x8x16xbf16>
    %14 = vector.shape_cast %13 : vector<8x1x8x16xbf16> to vector<8x8x16xbf16>
    %15 = tpu.concatenate %6, %8, %10, %12, %14 in 2 : vector<8x8x16xbf16>, vector<8x8x16xbf16>, vector<8x8x16xbf16>, vector<8x8x16xbf16>, vector<8x8x16xbf16> -> vector<8x8x80xbf16>
    %c0_9 = arith.constant 0 : index
    %c0_10 = arith.constant 0 : index
    %16 = vector.load %arg4[%c0_9, %c0_10] : memref<80x32xbf16, #tpu.memory_space<vmem>>, vector<80x32xbf16>
    %c0_11 = arith.constant 0 : index
    %c0_12 = arith.constant 0 : index
    %17 = vector.load %arg5[%c0_11, %c0_12] : memref<1x32xf32, #tpu.memory_space<vmem>>, vector<1x32xf32>
    %18 = vector.extract_strided_slice %15 {offsets = [0, 0, 0], sizes = [1, 8, 80], strides = [1, 1, 1]} : vector<8x8x80xbf16> to vector<1x8x80xbf16>
    %19 = vector.shape_cast %18 : vector<1x8x80xbf16> to vector<8x80xbf16>
    %cst = arith.constant dense<0.000000e+00> : vector<8x32xf32>
    %20 = tpu.matmul %19, %16, %cst {dimension_numbers = #tpu.dot_dimension_numbers<[1], [0], [0], [1], [0, 0, 1, 1], [], []>} : vector<8x80xbf16>, vector<80x32xbf16>, vector<8x32xf32> -> vector<8x32xf32>
    %21 = vector.broadcast %17 : vector<1x32xf32> to vector<8x32xf32>
    %22 = arith.addf %20, %21 : vector<8x32xf32>
    %c0_13 = arith.constant 0 : index
    %c0_14 = arith.constant 0 : index
    %c0_15 = arith.constant 0 : index
    %23 = vector.load %arg6[%c0_13, %c0_14, %c0_15] : memref<1x64x32xf32, #tpu.memory_space<vmem>>, vector<1x8x32xf32>
    %24 = vector.shape_cast %23 : vector<1x8x32xf32> to vector<8x32xf32>
    %25 = vector.shape_cast %22 : vector<8x32xf32> to vector<1x8x32xf32>
    tpu.vector_store %arg6[%c0_13, %c0_14, %c0_15], %25 {strides = array<i32>} : memref<1x64x32xf32, #tpu.memory_space<vmem>>, vector<1x8x32xf32>,
    %26 = vector.extract_strided_slice %15 {offsets = [1, 0, 0], sizes = [1, 8, 80], strides = [1, 1, 1]} : vector<8x8x80xbf16> to vector<1x8x80xbf16>
    %27 = vector.shape_cast %26 : vector<1x8x80xbf16> to vector<8x80xbf16>
    %cst_16 = arith.constant dense<0.000000e+00> : vector<8x32xf32>
    %28 = tpu.matmul %27, %16, %cst_16 {dimension_numbers = #tpu.dot_dimension_numbers<[1], [0], [0], [1], [0, 0, 1, 1], [], []>} : vector<8x80xbf16>, vector<80x32xbf16>, vector<8x32xf32> -> vector<8x32xf32>
    %29 = vector.broadcast %17 : vector<1x32xf32> to vector<8x32xf32>
    %30 = arith.addf %28, %29 : vector<8x32xf32>
    %c0_17 = arith.constant 0 : index
    %c8 = arith.constant 8 : index
    %c0_18 = arith.constant 0 : index
    %31 = vector.load %arg6[%c0_17, %c8, %c0_18] : memref<1x64x32xf32, #tpu.memory_space<vmem>>, vector<1x8x32xf32>
    %32 = vector.shape_cast %31 : vector<1x8x32xf32> to vector<8x32xf32>
    %33 = vector.shape_cast %30 : vector<8x32xf32> to vector<1x8x32xf32>
    tpu.vector_store %arg6[%c0_17, %c8, %c0_18], %33 {strides = array<i32>} : memref<1x64x32xf32, #tpu.memory_space<vmem>>, vector<1x8x32xf32>,
    %34 = vector.extract_strided_slice %15 {offsets = [2, 0, 0], sizes = [1, 8, 80], strides = [1, 1, 1]} : vector<8x8x80xbf16> to vector<1x8x80xbf16>
    %35 = vector.shape_cast %34 : vector<1x8x80xbf16> to vector<8x80xbf16>
    %cst_19 = arith.constant dense<0.000000e+00> : vector<8x32xf32>
    %36 = tpu.matmul %35, %16, %cst_19 {dimension_numbers = #tpu.dot_dimension_numbers<[1], [0], [0], [1], [0, 0, 1, 1], [], []>} : vector<8x80xbf16>, vector<80x32xbf16>, vector<8x32xf32> -> vector<8x32xf32>
    %37 = vector.broadcast %17 : vector<1x32xf32> to vector<8x32xf32>
    %38 = arith.addf %36, %37 : vector<8x32xf32>
    %c0_20 = arith.constant 0 : index
    %c16 = arith.constant 16 : index
    %c0_21 = arith.constant 0 : index
    %39 = vector.load %arg6[%c0_20, %c16, %c0_21] : memref<1x64x32xf32, #tpu.memory_space<vmem>>, vector<1x8x32xf32>
    %40 = vector.shape_cast %39 : vector<1x8x32xf32> to vector<8x32xf32>
    %41 = vector.shape_cast %38 : vector<8x32xf32> to vector<1x8x32xf32>
    tpu.vector_store %arg6[%c0_20, %c16, %c0_21], %41 {strides = array<i32>} : memref<1x64x32xf32, #tpu.memory_space<vmem>>, vector<1x8x32xf32>,
    %42 = vector.extract_strided_slice %15 {offsets = [3, 0, 0], sizes = [1, 8, 80], strides = [1, 1, 1]} : vector<8x8x80xbf16> to vector<1x8x80xbf16>
    %43 = vector.shape_cast %42 : vector<1x8x80xbf16> to vector<8x80xbf16>
    %cst_22 = arith.constant dense<0.000000e+00> : vector<8x32xf32>
    %44 = tpu.matmul %43, %16, %cst_22 {dimension_numbers = #tpu.dot_dimension_numbers<[1], [0], [0], [1], [0, 0, 1, 1], [], []>} : vector<8x80xbf16>, vector<80x32xbf16>, vector<8x32xf32> -> vector<8x32xf32>
    %45 = vector.broadcast %17 : vector<1x32xf32> to vector<8x32xf32>
    %46 = arith.addf %44, %45 : vector<8x32xf32>
    %c0_23 = arith.constant 0 : index
    %c24 = arith.constant 24 : index
    %c0_24 = arith.constant 0 : index
    %47 = vector.load %arg6[%c0_23, %c24, %c0_24] : memref<1x64x32xf32, #tpu.memory_space<vmem>>, vector<1x8x32xf32>
    %48 = vector.shape_cast %47 : vector<1x8x32xf32> to vector<8x32xf32>
    %49 = vector.shape_cast %46 : vector<8x32xf32> to vector<1x8x32xf32>
    tpu.vector_store %arg6[%c0_23, %c24, %c0_24], %49 {strides = array<i32>} : memref<1x64x32xf32, #tpu.memory_space<vmem>>, vector<1x8x32xf32>,
    %50 = vector.extract_strided_slice %15 {offsets = [4, 0, 0], sizes = [1, 8, 80], strides = [1, 1, 1]} : vector<8x8x80xbf16> to vector<1x8x80xbf16>
    %51 = vector.shape_cast %50 : vector<1x8x80xbf16> to vector<8x80xbf16>
    %cst_25 = arith.constant dense<0.000000e+00> : vector<8x32xf32>
    %52 = tpu.matmul %51, %16, %cst_25 {dimension_numbers = #tpu.dot_dimension_numbers<[1], [0], [0], [1], [0, 0, 1, 1], [], []>} : vector<8x80xbf16>, vector<80x32xbf16>, vector<8x32xf32> -> vector<8x32xf32>
    %53 = vector.broadcast %17 : vector<1x32xf32> to vector<8x32xf32>
    %54 = arith.addf %52, %53 : vector<8x32xf32>
    %c0_26 = arith.constant 0 : index
    %c32 = arith.constant 32 : index
    %c0_27 = arith.constant 0 : index
    %55 = vector.load %arg6[%c0_26, %c32, %c0_27] : memref<1x64x32xf32, #tpu.memory_space<vmem>>, vector<1x8x32xf32>
    %56 = vector.shape_cast %55 : vector<1x8x32xf32> to vector<8x32xf32>
    %57 = vector.shape_cast %54 : vector<8x32xf32> to vector<1x8x32xf32>
    tpu.vector_store %arg6[%c0_26, %c32, %c0_27], %57 {strides = array<i32>} : memref<1x64x32xf32, #tpu.memory_space<vmem>>, vector<1x8x32xf32>,
    %58 = vector.extract_strided_slice %15 {offsets = [5, 0, 0], sizes = [1, 8, 80], strides = [1, 1, 1]} : vector<8x8x80xbf16> to vector<1x8x80xbf16>
    %59 = vector.shape_cast %58 : vector<1x8x80xbf16> to vector<8x80xbf16>
    %cst_28 = arith.constant dense<0.000000e+00> : vector<8x32xf32>
    %60 = tpu.matmul %59, %16, %cst_28 {dimension_numbers = #tpu.dot_dimension_numbers<[1], [0], [0], [1], [0, 0, 1, 1], [], []>} : vector<8x80xbf16>, vector<80x32xbf16>, vector<8x32xf32> -> vector<8x32xf32>
    %61 = vector.broadcast %17 : vector<1x32xf32> to vector<8x32xf32>
    %62 = arith.addf %60, %61 : vector<8x32xf32>
    %c0_29 = arith.constant 0 : index
    %c40 = arith.constant 40 : index
    %c0_30 = arith.constant 0 : index
    %63 = vector.load %arg6[%c0_29, %c40, %c0_30] : memref<1x64x32xf32, #tpu.memory_space<vmem>>, vector<1x8x32xf32>
    %64 = vector.shape_cast %63 : vector<1x8x32xf32> to vector<8x32xf32>
    %65 = vector.shape_cast %62 : vector<8x32xf32> to vector<1x8x32xf32>
    tpu.vector_store %arg6[%c0_29, %c40, %c0_30], %65 {strides = array<i32>} : memref<1x64x32xf32, #tpu.memory_space<vmem>>, vector<1x8x32xf32>,
    %66 = vector.extract_strided_slice %15 {offsets = [6, 0, 0], sizes = [1, 8, 80], strides = [1, 1, 1]} : vector<8x8x80xbf16> to vector<1x8x80xbf16>
    %67 = vector.shape_cast %66 : vector<1x8x80xbf16> to vector<8x80xbf16>
    %cst_31 = arith.constant dense<0.000000e+00> : vector<8x32xf32>
    %68 = tpu.matmul %67, %16, %cst_31 {dimension_numbers = #tpu.dot_dimension_numbers<[1], [0], [0], [1], [0, 0, 1, 1], [], []>} : vector<8x80xbf16>, vector<80x32xbf16>, vector<8x32xf32> -> vector<8x32xf32>
    %69 = vector.broadcast %17 : vector<1x32xf32> to vector<8x32xf32>
    %70 = arith.addf %68, %69 : vector<8x32xf32>
    %c0_32 = arith.constant 0 : index
    %c48 = arith.constant 48 : index
    %c0_33 = arith.constant 0 : index
    %71 = vector.load %arg6[%c0_32, %c48, %c0_33] : memref<1x64x32xf32, #tpu.memory_space<vmem>>, vector<1x8x32xf32>
    %72 = vector.shape_cast %71 : vector<1x8x32xf32> to vector<8x32xf32>
    %73 = vector.shape_cast %70 : vector<8x32xf32> to vector<1x8x32xf32>
    tpu.vector_store %arg6[%c0_32, %c48, %c0_33], %73 {strides = array<i32>} : memref<1x64x32xf32, #tpu.memory_space<vmem>>, vector<1x8x32xf32>,
    %74 = vector.extract_strided_slice %15 {offsets = [7, 0, 0], sizes = [1, 8, 80], strides = [1, 1, 1]} : vector<8x8x80xbf16> to vector<1x8x80xbf16>
    %75 = vector.shape_cast %74 : vector<1x8x80xbf16> to vector<8x80xbf16>
    %cst_34 = arith.constant dense<0.000000e+00> : vector<8x32xf32>
    %76 = tpu.matmul %75, %16, %cst_34 {dimension_numbers = #tpu.dot_dimension_numbers<[1], [0], [0], [1], [0, 0, 1, 1], [], []>} : vector<8x80xbf16>, vector<80x32xbf16>, vector<8x32xf32> -> vector<8x32xf32>
    %77 = vector.broadcast %17 : vector<1x32xf32> to vector<8x32xf32>
    %78 = arith.addf %76, %77 : vector<8x32xf32>
    %c0_35 = arith.constant 0 : index
    %c56 = arith.constant 56 : index
    %c0_36 = arith.constant 0 : index
    %79 = vector.load %arg6[%c0_35, %c56, %c0_36] : memref<1x64x32xf32, #tpu.memory_space<vmem>>, vector<1x8x32xf32>
    %80 = vector.shape_cast %79 : vector<1x8x32xf32> to vector<8x32xf32>
    %81 = vector.shape_cast %78 : vector<8x32xf32> to vector<1x8x32xf32>
    tpu.vector_store %arg6[%c0_35, %c56, %c0_36], %81 {strides = array<i32>} : memref<1x64x32xf32, #tpu.memory_space<vmem>>, vector<1x8x32xf32>,
    return
  }
  func.func @transform_0(%arg0: i32, %arg1: i32) -> (i32, i32, i32, i32, i32) {
    %c0_i32 = arith.constant 0 : i32
    %c0_i32_0 = arith.constant 0 : i32
    %c0_i32_1 = arith.constant 0 : i32
    %c0_i32_2 = arith.constant 0 : i32
    return %arg0, %arg1, %c0_i32, %c0_i32_0, %c0_i32_1 : i32, i32, i32, i32, i32
  }
  func.func @transform_1(%arg0: i32, %arg1: i32) -> (i32, i32, i32, i32, i32) {
    %c4_i32 = arith.constant 4 : i32
    %0 = arith.muli %arg1, %c4_i32 : i32
    %c4_i32_0 = arith.constant 4 : i32
    %1 = arith.addi %0, %c4_i32_0 : i32
    %c0_i32 = arith.constant 0 : i32
    %c0_i32_1 = arith.constant 0 : i32
    %c0_i32_2 = arith.constant 0 : i32
    %c0_i32_3 = arith.constant 0 : i32
    return %arg0, %1, %c0_i32, %c0_i32_1, %c0_i32_2 : i32, i32, i32, i32, i32
  }
  func.func @transform_2(%arg0: i32, %arg1: i32) -> (i32, i32) {
    %c0_i32 = arith.constant 0 : i32
    %c0_i32_0 = arith.constant 0 : i32
    %c0_i32_1 = arith.constant 0 : i32
    return %c0_i32, %c0_i32_0 : i32, i32
  }
  func.func @transform_3(%arg0: i32, %arg1: i32) -> (i32, i32) {
    %c0_i32 = arith.constant 0 : i32
    %c0_i32_0 = arith.constant 0 : i32
    %c0_i32_1 = arith.constant 0 : i32
    return %c0_i32, %c0_i32_0 : i32, i32
  }
  func.func @transform_4(%arg0: i32, %arg1: i32) -> (i32, i32, i32) {
    %c0_i32 = arith.constant 0 : i32
    %c0_i32_0 = arith.constant 0 : i32
    return %arg0, %arg1, %c0_i32 : i32, i32, i32
  }
}

</mosaic_0001>

<llo_original>
// kernel: patch_embed_forward.1
$region0: #{patch_embed_forward.1}
  #allocation0 [shape = 'u32[]', space=smem, size = 0x4, offset = 0x4, fixed_abs, tag = 'smem constant byte address 0x4 - core index']
  #allocation1 [shape = 'u32[144,128]{1,0:T(1,128)}', space=vmem, size = 0x12000, scoped, tag = 'internal scratch']
  %s0 = inlined_call_operand.vmem [shape: bf16[2,10,2,8,16], index: 0, kind: input, shape index: {}, may-alias: {0,1}]
  %s1 = inlined_call_operand.vmem [shape: bf16[2,10,2,8,16], index: 1, kind: input, shape index: {}, may-alias: {0,1}]
  %s2 = inlined_call_operand.vmem [shape: bf16[80,32], index: 2, kind: input, shape index: {}]
  %s3 = inlined_call_operand.vmem [shape: f32[1,32], index: 3, kind: input, shape index: {}]
  %s4 = inlined_call_operand.vmem [shape: f32[2,64,32], index: 4, kind: output, shape index: {}]
  %s5 = sld [smem:[#allocation0]]
  $region49: #{patch_embed_forward.1} parent=0
    _
  %s7 = ssub.s32 1, %s5
  %s8 = scalar_select 0, %s7, %s5
  loop: start=0, step=1, limit=4
  $region2: #{patch_embed_forward.1} parent=0 // loop_pre_header
    _
  $region3: #{patch_embed_forward.1} parent=0 // loop_header
    %s10 = sphi 0, %s14
    %p11 = scmp.ge.s32.totalorder %s10, 4
    %s17 = sphi 0, %s29
    %s18 = sphi 0, %s25
    %s19 = sphi 0, %s17
    %s20 = sphi 0, %s18
    %s21 = sphi 0, %s19
    %s22 = sphi 0, %s20
    %s34 = sphi 0, %s36
    %s37 = sphi 0, %s34
    %s38 = sphi 0, %s37
    %s54 = sphi 0, %s38
    %s66 = sphi 0, %s68
    %s69 = sphi 0, %s66
    %s70 = sphi 0, %s69
    %s86 = sphi 0, %s70
    %s90 = sphi 0, %s90
    %s92 = sphi 0, %s90
    %s93 = sphi 0, %s92
    %s107 = sphi 0, %s93
    %s111 = sphi 0, %s111
    %s113 = sphi 0, %s111
    %s114 = sphi 0, %s113
    %s128 = sphi 0, %s114
    %s136 = sphi 0, %s138
    %s139 = sphi 0, %s136
    %s140 = sphi 0, %s139
    %s156 = sphi 0, %s140
  $region4: #{patch_embed_forward.1} parent=0 // loop_header_branch
    %13 = sbr.rel (%p11) target = $region8
  $region5: #{patch_embed_forward.1} parent=0 // loop_body
    %s15 = ssub.s32 %s10, 1
    %s16 = ssub.s32 %s10, 2
    %s23 = sadd.s32 1, %s18
    %p24 = scmp.ge.s32.totalorder %s23, 1
    %s25 = scalar_select %p24, 0, %s23
    %s26 = sadd.s32 1, %s17
    %s27 = scalar_select %p24, %s26, %s17
    %p28 = scmp.ge.s32.totalorder %s27, 2
    %s29 = scalar_select %p28, 0, %s27
    %s30 = ssub.s32 %s17, %s29
    %s31 = ssub.s32 %s18, %s25
    %s32 = sor.u32 %s30, %s31
    %p33 = scmp.eq.s32.totalorder %s32, 0
    %s35 = sadd.s32 %s34, 1
    %s36 = scalar_select %p33, %s34, %s35
    %p39 = pneg %p33
    %p40 = scmp.eq.s32.totalorder %s10, 1
    %p41 = por %p39, %p40
    %p42 = scmp.ne.s32.totalorder %s34, %s37
    %p43 = scmp.eq.s32.totalorder %s10, 0
    %p44 = por %p42, %p43
    %p45 = scmp.ne.s32.totalorder %s34, %s37
    %p46 = scmp.eq.s32.totalorder %s15, 1
    %p47 = por %p45, %p46
    %p48 = scmp.ne.s32.totalorder %s37, %s38
    %p49 = scmp.eq.s32.totalorder %s15, 0
    %p50 = por %p48, %p49
    %p51 = scmp.ne.s32.totalorder %s37, %s38
    %p52 = scmp.eq.s32.totalorder %s16, 1
    %p53 = por %p51, %p52
    %p55 = scmp.ne.s32.totalorder %s38, %s54
    %p56 = scmp.eq.s32.totalorder %s16, 0
    %p57 = por %p55, %p56
    %s58 = smul.u32 %s18, 4
    %s59 = sadd.s32 %s58, 4
    %s60 = smul.u32 %s25, 4
    %s61 = sadd.s32 %s60, 4
    %s62 = ssub.s32 %s17, %s29
    %s63 = ssub.s32 %s59, %s61
    %s64 = sor.u32 %s62, %s63
    %p65 = scmp.eq.s32.totalorder %s64, 0
    %s67 = sadd.s32 %s66, 1
    %s68 = scalar_select %p65, %s66, %s67
    %p71 = pneg %p65
    %p72 = scmp.eq.s32.totalorder %s10, 1
    %p73 = por %p71, %p72
    %p74 = scmp.ne.s32.totalorder %s66, %s69
    %p75 = scmp.eq.s32.totalorder %s10, 0
    %p76 = por %p74, %p75
    %p77 = scmp.ne.s32.totalorder %s66, %s69
    %p78 = scmp.eq.s32.totalorder %s15, 1
    %p79 = por %p77, %p78
    %p80 = scmp.ne.s32.totalorder %s69, %s70
    %p81 = scmp.eq.s32.totalorder %s15, 0
    %p82 = por %p80, %p81
    %p83 = scmp.ne.s32.totalorder %s69, %s70
    %p84 = scmp.eq.s32.totalorder %s16, 1
    %p85 = por %p83, %p84
    %p87 = scmp.ne.s32.totalorder %s70, %s86
    %p88 = scmp.eq.s32.totalorder %s16, 0
    %p89 = por %p87, %p88
    %s91 = sadd.s32 %s90, 1
    %p94 = scmp.eq.s32.totalorder %s10, 1
    %p95 = scmp.ne.s32.totalorder %s90, %s92
    %p96 = scmp.eq.s32.totalorder %s10, 0
    %p97 = por %p95, %p96
    %p98 = scmp.ne.s32.totalorder %s90, %s92
    %p99 = scmp.eq.s32.totalorder %s15, 1
    %p100 = por %p98, %p99
    %p101 = scmp.ne.s32.totalorder %s92, %s93
    %p102 = scmp.eq.s32.totalorder %s15, 0
    %p103 = por %p101, %p102
    %p104 = scmp.ne.s32.totalorder %s92, %s93
    %p105 = scmp.eq.s32.totalorder %s16, 1
    %p106 = por %p104, %p105
    %p108 = scmp.ne.s32.totalorder %s93, %s107
    %p109 = scmp.eq.s32.totalorder %s16, 0
    %p110 = por %p108, %p109
    %s112 = sadd.s32 %s111, 1
    %p115 = scmp.eq.s32.totalorder %s10, 1
    %p116 = scmp.ne.s32.totalorder %s111, %s113
    %p117 = scmp.eq.s32.totalorder %s10, 0
    %p118 = por %p116, %p117
    %p119 = scmp.ne.s32.totalorder %s111, %s113
    %p120 = scmp.eq.s32.totalorder %s15, 1
    %p121 = por %p119, %p120
    %p122 = scmp.ne.s32.totalorder %s113, %s114
    %p123 = scmp.eq.s32.totalorder %s15, 0
    %p124 = por %p122, %p123
    %p125 = scmp.ne.s32.totalorder %s113, %s114
    %p126 = scmp.eq.s32.totalorder %s16, 1
    %p127 = por %p125, %p126
    %p129 = scmp.ne.s32.totalorder %s114, %s128
    %p130 = scmp.eq.s32.totalorder %s16, 0
    %p131 = por %p129, %p130
    %s132 = ssub.s32 %s17, %s29
    %s133 = ssub.s32 %s18, %s25
    %s134 = sor.u32 %s132, %s133
    %p135 = scmp.eq.s32.totalorder %s134, 0
    %s137 = sadd.s32 %s136, 1
    %s138 = scalar_select %p135, %s136, %s137
    %p141 = pneg %p135
    %p142 = scmp.eq.s32.totalorder %s10, 1
    %p143 = por %p141, %p142
    %p144 = scmp.ne.s32.totalorder %s136, %s139
    %p145 = scmp.eq.s32.totalorder %s10, 0
    %p146 = por %p144, %p145
    %p147 = scmp.ne.s32.totalorder %s136, %s139
    %p148 = scmp.eq.s32.totalorder %s15, 1
    %p149 = por %p147, %p148
    %p150 = scmp.ne.s32.totalorder %s139, %s140
    %p151 = scmp.eq.s32.totalorder %s15, 0
    %p152 = por %p150, %p151
    %p153 = scmp.ne.s32.totalorder %s139, %s140
    %p154 = scmp.eq.s32.totalorder %s16, 1
    %p155 = por %p153, %p154
    %p157 = scmp.ne.s32.totalorder %s140, %s156
    %p158 = scmp.eq.s32.totalorder %s16, 0
    %p159 = por %p157, %p158
    %p160 = scmp.le.s32.totalorder 1, %s10
    %p161 = scmp.lt.s32.totalorder %s10, 3
    %p162 = pnand %p160, %p161
    %p163 = pneg %p162
    // Predicated region
    $region9: #{patch_embed_forward.1} parent=5 // pred_check
      _
    $region10: #{patch_embed_forward.1} parent=5 // pred_check_branch
      %165 = sbr.rel (%p162) target = $region12
    $region11: #{patch_embed_forward.1} parent=5 // pred_region
      %s166 = ssub.s32 %s10, 1
      // Predicated region
      $region13: #{patch_embed_forward.1} parent=11 // pred_check
        %p167 = pneg %p103
      $region14: #{patch_embed_forward.1} parent=11 // pred_check_branch
        %169 = sbr.rel (%p167) target = $region16
      $region15: #{patch_embed_forward.1} parent=11 // pred_region
        _
      $region16: #{patch_embed_forward.1} parent=11 // pred_fallthru
        _
      // Predicated region
      $region17: #{patch_embed_forward.1} parent=11 // pred_check
        %p170 = pneg %p124
      $region18: #{patch_embed_forward.1} parent=11 // pred_check_branch
        %172 = sbr.rel (%p170) target = $region20
      $region19: #{patch_embed_forward.1} parent=11 // pred_region
        _
      $region20: #{patch_embed_forward.1} parent=11 // pred_fallthru
        _
    $region12: #{patch_embed_forward.1} parent=5 // pred_fallthru
      _
    %p173 = scmp.lt.s32.totalorder %s10, 2
    // Predicated region
    $region21: #{patch_embed_forward.1} parent=5 // pred_check
      %p174 = pneg %p173
    $region22: #{patch_embed_forward.1} parent=5 // pred_check_branch
      %176 = sbr.rel (%p174) target = $region24
    $region23: #{patch_embed_forward.1} parent=5 // pred_region
      // Predicated region
      $region25: #{patch_embed_forward.1} parent=23 // pred_check
        %p177 = pneg %p44
      $region26: #{patch_embed_forward.1} parent=23 // pred_check_branch
        %179 = sbr.rel (%p177) target = $region28
      $region27: #{patch_embed_forward.1} parent=23 // pred_region
        %s180 = smul.u32 8, %s18
        %s181 = ssub.s32 10, %s180
        %p182 = scmp.lt.s32.totalorder %s181, 8
        %s183 = scalar_select %p182, %s181, 8
        %s184 = smul.u32 64, %s183
        %s185 = smul.u32 %s184, 2
        %p186 = scmp.lt.s32.totalorder %s17, 1
        %s187 = scalar_select %p186, %s17, 1
        %p188 = scmp.lt.s32.totalorder %s180, 9
        %s189 = scalar_select %p188, %s180, 9
        %s190 = smul.addr %s189, 2
        %s191 = smul.addr %s187, 20
        %s192 = sadd.s32 %s190, %s191
        %s193 = smul.addr %s192, 4
        %s194 = scalar_lea.vmem %s0, %s193
        %s195 = smul.u32 8, %s18
        %s196 = ssub.s32 10, %s195
        %p197 = scmp.lt.s32.totalorder %s196, 8
        %s198 = scalar_select %p197, %s196, 8
        %s199 = smul.u32 64, %s198
        %s200 = smul.u32 %s199, 2
      $region28: #{patch_embed_forward.1} parent=23 // pred_fallthru
        _
      // Predicated region
      $region29: #{patch_embed_forward.1} parent=23 // pred_check
        %p201 = pneg %p76
      $region30: #{patch_embed_forward.1} parent=23 // pred_check_branch
        %203 = sbr.rel (%p201) target = $region32
      $region31: #{patch_embed_forward.1} parent=23 // pred_region
        %s204 = smul.u32 %s18, 4
        %s205 = sadd.s32 %s204, 4
        %s206 = smul.u32 2, %s205
        %p207 = scmp.lt.s32.totalorder %s17, 1
        %s208 = scalar_select %p207, %s17, 1
        %p209 = scmp.lt.s32.totalorder %s206, 9
        %s210 = scalar_select %p209, %s206, 9
        %s211 = smul.addr %s210, 2
        %s212 = smul.addr %s208, 20
        %s213 = sadd.s32 %s211, %s212
        %s214 = smul.addr %s213, 4
        %s215 = scalar_lea.vmem %s1, %s214
        %s216 = smul.u32 %s18, 4
        %s217 = sadd.s32 %s216, 4
        %s218 = smul.u32 2, %s217
      $region32: #{patch_embed_forward.1} parent=23 // pred_fallthru
        _
    $region24: #{patch_embed_forward.1} parent=5 // pred_fallthru
      _
    %p219 = scmp.le.s32.totalorder 1, %s10
    %p220 = scmp.lt.s32.totalorder %s10, 3
    %p221 = pnand %p219, %p220
    %p222 = pneg %p221
    // Predicated region
    $region33: #{patch_embed_forward.1} parent=5 // pred_check
      _
    $region34: #{patch_embed_forward.1} parent=5 // pred_check_branch
      %224 = sbr.rel (%p221) target = $region36
    $region35: #{patch_embed_forward.1} parent=5 // pred_region
      %s225 = ssub.s32 %s10, 1
      %s226 = smul.u32 8, %s20
      %s227 = ssub.s32 10, %s226
      %p228 = scmp.lt.s32.totalorder %s227, 8
      %s229 = scalar_select %p228, %s227, 8
      %s230 = smul.u32 64, %s229
      %s231 = smul.u32 %s230, 2
      %p232 = scmp.lt.s32.totalorder %s19, 1
      %s233 = scalar_select %p232, %s19, 1
      %p234 = scmp.lt.s32.totalorder %s226, 9
      %s235 = scalar_select %p234, %s226, 9
      %s236 = smul.addr %s235, 2
      %s237 = smul.addr %s233, 20
      %s238 = sadd.s32 %s236, %s237
      %s239 = smul.addr %s238, 4
      %s240 = scalar_lea.vmem %s0, %s239
      %p241 = pneg %p50
      %p242 = pneg %p47
      %s243 = smul.u32 %s20, 4
      %s244 = sadd.s32 %s243, 4
      %s245 = smul.u32 2, %s244
      %p246 = scmp.lt.s32.totalorder %s19, 1
      %s247 = scalar_select %p246, %s19, 1
      %p248 = scmp.lt.s32.totalorder %s245, 9
      %s249 = scalar_select %p248, %s245, 9
      %s250 = smul.addr %s249, 2
      %s251 = smul.addr %s247, 20
      %s252 = sadd.s32 %s250, %s251
      %s253 = smul.addr %s252, 4
      %s254 = scalar_lea.vmem %s1, %s253
      %p255 = pneg %p82
      %p256 = pneg %p79
      %p257 = pneg %p103
      %p258 = pneg %p100
      %p259 = pneg %p124
      %p260 = pneg %p121
      %p261 = pneg %p152
      %p262 = pneg %p149
      %s263 = smul.u32 8, %s20
      %p264 = scmp.lt.s32.totalorder %s19, 1
      %s265 = scalar_select %p264, %s19, 1
      %p266 = scmp.lt.s32.totalorder %s263, 7
      %s267 = scalar_select %p266, %s263, 7
      %s268 = smul.addr %s265, 8
      %s269 = sadd.s32 %s267, %s268
      %s270 = smul.addr %s269, 8
      %s271 = scalar_lea.vmem %s4, %s270
      %s272 = smul.u32 8, %s20
      %s273 = ssub.s32 10, %s272
      %p274 = scmp.lt.s32.totalorder %s273, 8
      %s275 = scalar_select %p274, %s273, 8
      %s276 = smul.u32 64, %s275
      %s277 = smul.u32 %s276, 2
      %p278 = scmp.lt.s32.totalorder %s19, 1
      %s279 = scalar_select %p278, %s19, 1
      %p280 = scmp.lt.s32.totalorder %s272, 9
      %s281 = scalar_select %p280, %s272, 9
      %s282 = smul.addr %s281, 2
      %s283 = smul.addr %s279, 20
      %s284 = sadd.s32 %s282, %s283
      %s285 = smul.addr %s284, 4
      %s286 = scalar_lea.vmem %s0, %s285
      %s287 = smul.u32 8, %s20
      %s288 = ssub.s32 10, %s287
      %p289 = scmp.lt.s32.totalorder %s288, 8
      %s290 = scalar_select %p289, %s288, 8
      %s291 = smul.u32 64, %s290
      %s292 = smul.u32 %s291, 2
      %s293 = smul.u32 %s20, 4
      %s294 = sadd.s32 %s293, 4
      %s295 = smul.u32 2, %s294
      %p296 = scmp.lt.s32.totalorder %s19, 1
      %s297 = scalar_select %p296, %s19, 1
      %p298 = scmp.lt.s32.totalorder %s295, 9
      %s299 = scalar_select %p298, %s295, 9
      %s300 = smul.addr %s299, 2
      %s301 = smul.addr %s297, 20
      %s302 = sadd.s32 %s300, %s301
      %s303 = smul.addr %s302, 4
      %s304 = scalar_lea.vmem %s1, %s303
      %s305 = smul.u32 %s20, 4
      %s306 = sadd.s32 %s305, 4
      %s307 = smul.u32 2, %s306
      %s308 = smul.u32 8, %s20
      %p309 = scmp.lt.s32.totalorder %s19, 1
      %s310 = scalar_select %p309, %s19, 1
      %p311 = scmp.lt.s32.totalorder %s308, 7
      %s312 = scalar_select %p311, %s308, 7
      %s313 = smul.addr %s310, 8
      %s314 = sadd.s32 %s312, %s313
      %s315 = smul.addr %s314, 8
      %s316 = scalar_lea.vmem %s4, %s315
      %s317 = smul.u32 8, %s20
      %v319 = vld [vmem:[%s286] sm:$0xf]
      %v320 = vld [vmem:[%s286 + $0x4] sm:$0xf]
      %v321 = vld [vmem:[%s286 + $0x8] sm:$0xf]
      %v322 = vld [vmem:[%s286 + $0xc] sm:$0xf]
      %v323 = vld [vmem:[%s286 + $0x10] sm:$0xf]
      %v324 = vld [vmem:[%s286 + $0x14] sm:$0xf]
      %v325 = vld [vmem:[%s286 + $0x18] sm:$0xf]
      %v326 = vld [vmem:[%s286 + $0x1c] sm:$0xf]
      %v327 = vld [vmem:[%s286 + $0x20] sm:$0xf]
      %v328 = vld [vmem:[%s286 + $0x24] sm:$0xf]
      %v329 = vld [vmem:[%s286 + $0x28] sm:$0xf]
      %v330 = vld [vmem:[%s286 + $0x2c] sm:$0xf]
      %v331 = vld [vmem:[%s286 + $0x30] sm:$0xf]
      %v332 = vld [vmem:[%s286 + $0x34] sm:$0xf]
      %v333 = vld [vmem:[%s286 + $0x38] sm:$0xf]
      %v334 = vld [vmem:[%s286 + $0x3c] sm:$0xf]
      %v335 = vld [vmem:[%s304] sm:$0xf]
      %v336 = vld [vmem:[%s304 + $0x4] sm:$0xf]
      %v337 = vld [vmem:[%s304 + $0x8] sm:$0xf]
      %v346 = vunpack.c.l.b16 %v320
      %v347 = vunpack.c.l.b16 %v322
      %v348 = vunpack.c.l.b16 %v324
      %v349 = vunpack.c.l.b16 %v326
      %v350 = vunpack.c.l.b16 %v328
      %v351 = vunpack.c.l.b16 %v330
      %v352 = vunpack.c.l.b16 %v332
      %v353 = vunpack.c.l.b16 %v334
      %v354 = vpack.c.b16 %v346, %v346
      %v355 = vpack.c.b16 %v347, %v347
      %v356 = vpack.c.b16 %v348, %v348
      %v357 = vpack.c.b16 %v349, %v349
      %v358 = vpack.c.b16 %v350, %v350
      %v359 = vpack.c.b16 %v351, %v351
      %v360 = vpack.c.b16 %v352, %v352
      %v361 = vpack.c.b16 %v353, %v353
      %362 = vrot.lane.b32.xlu0 %v354, 16
      %v363 = vpop.permute.xlu0 %362
      %364 = vrot.lane.b32.xlu0 %v355, 16
      %v365 = vpop.permute.xlu0 %364
      %366 = vrot.lane.b32.xlu0 %v356, 16
      %v367 = vpop.permute.xlu0 %366
      %368 = vrot.lane.b32.xlu0 %v357, 16
      %v369 = vpop.permute.xlu0 %368
      %370 = vrot.lane.b32.xlu0 %v358, 16
      %v371 = vpop.permute.xlu0 %370
      %372 = vrot.lane.b32.xlu0 %v359, 16
      %v373 = vpop.permute.xlu0 %372
      %374 = vrot.lane.b32.xlu0 %v360, 16
      %v375 = vpop.permute.xlu0 %374
      %376 = vrot.lane.b32.xlu0 %v361, 16
      %v377 = vpop.permute.xlu0 %376
      %v386 = vunpack.c.l.b16 %v321
      %v387 = vunpack.c.l.b16 %v323
      %v388 = vunpack.c.l.b16 %v325
      %v389 = vunpack.c.l.b16 %v327
      %v390 = vunpack.c.l.b16 %v329
      %v391 = vunpack.c.l.b16 %v331
      %v392 = vunpack.c.l.b16 %v333
      %v393 = vunpack.c.l.b16 %v335
      %v394 = vpack.c.b16 %v386, %v386
      %v395 = vpack.c.b16 %v387, %v387
      %v396 = vpack.c.b16 %v388, %v388
      %v397 = vpack.c.b16 %v389, %v389
      %v398 = vpack.c.b16 %v390, %v390
      %v399 = vpack.c.b16 %v391, %v391
      %v400 = vpack.c.b16 %v392, %v392
      %v401 = vpack.c.b16 %v393, %v393
      %402 = vrot.lane.b32.xlu0 %v394, 32
      %v403 = vpop.permute.xlu0 %402
      %404 = vrot.lane.b32.xlu0 %v395, 32
      %v405 = vpop.permute.xlu0 %404
      %406 = vrot.lane.b32.xlu0 %v396, 32
      %v407 = vpop.permute.xlu0 %406
      %408 = vrot.lane.b32.xlu0 %v397, 32
      %v409 = vpop.permute.xlu0 %408
      %410 = vrot.lane.b32.xlu0 %v398, 32
      %v411 = vpop.permute.xlu0 %410
      %412 = vrot.lane.b32.xlu0 %v399, 32
      %v413 = vpop.permute.xlu0 %412
      %414 = vrot.lane.b32.xlu0 %v400, 32
      %v415 = vpop.permute.xlu0 %414
      %416 = vrot.lane.b32.xlu0 %v401, 32
      %v417 = vpop.permute.xlu0 %416
      %v419 = vunpack.c.l.b16 %v336
      %v420 = vpack.c.b16 %v419, %v419
      %421 = vrot.lane.b32.xlu0 %v355, 48
      %v422 = vpop.permute.xlu0 %421
      %423 = vrot.lane.b32.xlu0 %v356, 48
      %v424 = vpop.permute.xlu0 %423
      %425 = vrot.lane.b32.xlu0 %v357, 48
      %v426 = vpop.permute.xlu0 %425
      %427 = vrot.lane.b32.xlu0 %v358, 48
      %v428 = vpop.permute.xlu0 %427
      %429 = vrot.lane.b32.xlu0 %v359, 48
      %v430 = vpop.permute.xlu0 %429
      %431 = vrot.lane.b32.xlu0 %v360, 48
      %v432 = vpop.permute.xlu0 %431
      %433 = vrot.lane.b32.xlu0 %v361, 48
      %v434 = vpop.permute.xlu0 %433
      %435 = vrot.lane.b32.xlu0 %v420, 48
      %v436 = vpop.permute.xlu0 %435
      %v438 = vunpack.c.l.b16 %v337
      %v439 = vpack.c.b16 %v438, %v438
      %440 = vrot.lane.b32.xlu0 %v395, 64
      %v441 = vpop.permute.xlu0 %440
      %442 = vrot.lane.b32.xlu0 %v396, 64
      %v443 = vpop.permute.xlu0 %442
      %444 = vrot.lane.b32.xlu0 %v397, 64
      %v445 = vpop.permute.xlu0 %444
      %446 = vrot.lane.b32.xlu0 %v398, 64
      %v447 = vpop.permute.xlu0 %446
      %448 = vrot.lane.b32.xlu0 %v399, 64
      %v449 = vpop.permute.xlu0 %448
      %450 = vrot.lane.b32.xlu0 %v400, 64
      %v451 = vpop.permute.xlu0 %450
      %452 = vrot.lane.b32.xlu0 %v401, 64
      %v453 = vpop.permute.xlu0 %452
      %454 = vrot.lane.b32.xlu0 %v439, 64
      %v455 = vpop.permute.xlu0 %454
      %vm456 = vcmask 130048
      %v459 = vsel %vm456, %v319, %v363
      %v462 = vsel %vm456, %v321, %v365
      %v465 = vsel %vm456, %v323, %v367
      %v468 = vsel %vm456, %v325, %v369
      %v471 = vsel %vm456, %v327, %v371
      %v474 = vsel %vm456, %v329, %v373
      %v477 = vsel %vm456, %v331, %v375
      %v480 = vsel %vm456, %v333, %v377
      %vm481 = vcmask 261120
      %v483 = vsel %vm481, %v459, %v403
      %v485 = vsel %vm481, %v462, %v405
      %v487 = vsel %vm481, %v465, %v407
      %v489 = vsel %vm481, %v468, %v409
      %v491 = vsel %vm481, %v471, %v411
      %v493 = vsel %vm481, %v474, %v413
      %v495 = vsel %vm481, %v477, %v415
      %v497 = vsel %vm481, %v480, %v417
      %vm498 = vcmask 392192
      %v500 = vsel %vm498, %v483, %v422
      %v502 = vsel %vm498, %v485, %v424
      %v504 = vsel %vm498, %v487, %v426
      %v506 = vsel %vm498, %v489, %v428
      %v508 = vsel %vm498, %v491, %v430
      %v510 = vsel %vm498, %v493, %v432
      %v512 = vsel %vm498, %v495, %v434
      %v514 = vsel %vm498, %v497, %v436
      %vm515 = vcmask 523264
      %v517 = vsel %vm515, %v500, %v441
      %v519 = vsel %vm515, %v502, %v443
      %v521 = vsel %vm515, %v504, %v445
      %v523 = vsel %vm515, %v506, %v447
      %v525 = vsel %vm515, %v508, %v449
      %v527 = vsel %vm515, %v510, %v451
      %v529 = vsel %vm515, %v512, %v453
      %v531 = vsel %vm515, %v514, %v455
      %v532 = vld [vmem:[%s2] sm:$0xf]
      %v533 = vld [vmem:[%s2 + $0x4] sm:$0xf]
      %v534 = vld [vmem:[%s2 + $0x8] sm:$0xf]
      %v535 = vld [vmem:[%s2 + $0xc] sm:$0xf]
      %v536 = vld [vmem:[%s2 + $0x10] sm:$0xf]
      %v537 = vld [vmem:[%s2 + $0x14] sm:$0xf]
      %v538 = vld [vmem:[%s2 + $0x18] sm:$0xf]
      %v539 = vld [vmem:[%s2 + $0x1c] sm:$0xf]
      %v540 = vld [vmem:[%s2 + $0x20] sm:$0xf]
      %v541 = vld [vmem:[%s2 + $0x24] sm:$0xf]
      %v542 = vld [vmem:[%s3] sm:$0x1]
      %v544 = vlaneseq
      %v545 = vshrl.u32 %v544, 7
      %v546 = vsub.s32 0, %v545
      %v547 = vrot.slane %v542, %v546
      %v559 = vunpack.c.l.b16 %v532
      %v560 = vunpack.c.l.b16 %v533
      %v561 = vunpack.c.l.b16 %v534
      %v562 = vunpack.c.l.b16 %v535
      %v563 = vunpack.c.l.b16 %v536
      %v564 = vunpack.c.l.b16 %v537
      %v565 = vunpack.c.l.b16 %v538
      %v566 = vunpack.c.l.b16 %v539
      %v567 = vunpack.c.l.b16 %v540
      %v568 = vunpack.c.l.b16 %v541
      %v569 = vpack.c.b16 %v560, %v559
      %v570 = vpack.c.b16 %v562, %v561
      %v571 = vpack.c.b16 %v564, %v563
      %v572 = vpack.c.b16 %v566, %v565
      %v573 = vpack.c.b16 %v568, %v567
      %vm579 = vcmask 654336
      %v580 = vsel %vm579, %v517, 0
      %582 = vmatprep.subr.bf16.mxu0 0
      %583 = vmatpush1.bf16.msra.mxu0 %v569
      %584 = vmatprep.subr.bf16.mxu0 0
      %585 = vmatpush1.bf16.msra.mxu0 %v570
      %586 = vmatprep.subr.bf16.mxu0 0
      %587 = vmatpush1.bf16.msra.mxu0 %v571
      %588 = vmatprep.subr.bf16.mxu0 0
      %589 = vmatpush1.bf16.msra.mxu0 %v572
      %590 = vmatprep.subr.bf16.mxu0 0
      %591 = vmatpush1.bf16.msra.mxu0 %v573
      %592 = vmatprep.subr.bf16.mxu0 0
      %593 = vmatpush1.bf16.msra.mxu0 0
      %594 = vmatprep.subr.bf16.mxu0 0
      %595 = vmatpush1.bf16.msra.mxu0 0
      %596 = vmatprep.subr.bf16.mxu0 0
      %597 = vmatpush1.bf16.msra.mxu0 0
      %598 = vmatprep.subr.bf16.mxu0 0
      %599 = vmatpush1.bf16.msra.mxu0 0
      %600 = vmatprep.subr.bf16.mxu0 0
      %601 = vmatpush1.bf16.msra.mxu0 0
      %602 = vmatprep.subr.bf16.mxu0 0
      %603 = vmatpush1.bf16.msra.mxu0 0
      %604 = vmatprep.subr.bf16.mxu0 0
      %605 = vmatpush1.bf16.msra.mxu0 0
      %606 = vmatprep.subr.bf16.mxu0 0
      %607 = vmatpush1.bf16.msra.mxu0 0
      %608 = vmatprep.subr.bf16.mxu0 0
      %609 = vmatpush1.bf16.msra.mxu0 0
      %610 = vmatprep.subr.bf16.mxu0 0
      %611 = vmatpush1.bf16.msra.mxu0 0
      %612 = vmatprep.subr.bf16.mxu0 0
      %613 = vmatpush1.bf16.msra.mxu0 0
      %614 = vmatprep.mubr.bf16.mxu0 0
      %615 = vmatmul.mubr.bf16.gmra.mrb[0].mxu0 %v580
      %v616 = vpop.f32.mrb[0].mxu0
      %v617 = vadd.f32 %v547, %v616
      %v618 = vpop.f32.mrb[0].mxu0
      %v619 = vpop.f32.mrb[0].mxu0
      %v620 = vpop.f32.mrb[0].mxu0
      %621 = vdwg.mxu0
      %622 = vst.msk [vmem:[%s316] sm:$0xff] %vm481, %v617
      %v623 = vsel %vm579, %v519, 0
      %625 = vmatprep.subr.bf16.mxu0 0
      %626 = vmatpush1.bf16.msra.mxu0 %v569
      %627 = vmatprep.subr.bf16.mxu0 0
      %628 = vmatpush1.bf16.msra.mxu0 %v570
      %629 = vmatprep.subr.bf16.mxu0 0
      %630 = vmatpush1.bf16.msra.mxu0 %v571
      %631 = vmatprep.subr.bf16.mxu0 0
      %632 = vmatpush1.bf16.msra.mxu0 %v572
      %633 = vmatprep.subr.bf16.mxu0 0
      %634 = vmatpush1.bf16.msra.mxu0 %v573
      %635 = vmatprep.subr.bf16.mxu0 0
      %636 = vmatpush1.bf16.msra.mxu0 0
      %637 = vmatprep.subr.bf16.mxu0 0
      %638 = vmatpush1.bf16.msra.mxu0 0
      %639 = vmatprep.subr.bf16.mxu0 0
      %640 = vmatpush1.bf16.msra.mxu0 0
      %641 = vmatprep.subr.bf16.mxu0 0
      %642 = vmatpush1.bf16.msra.mxu0 0
      %643 = vmatprep.subr.bf16.mxu0 0
      %644 = vmatpush1.bf16.msra.mxu0 0
      %645 = vmatprep.subr.bf16.mxu0 0
      %646 = vmatpush1.bf16.msra.mxu0 0
      %647 = vmatprep.subr.bf16.mxu0 0
      %648 = vmatpush1.bf16.msra.mxu0 0
      %649 = vmatprep.subr.bf16.mxu0 0
      %650 = vmatpush1.bf16.msra.mxu0 0
      %651 = vmatprep.subr.bf16.mxu0 0
      %652 = vmatpush1.bf16.msra.mxu0 0
      %653 = vmatprep.subr.bf16.mxu0 0
      %654 = vmatpush1.bf16.msra.mxu0 0
      %655 = vmatprep.subr.bf16.mxu0 0
      %656 = vmatpush1.bf16.msra.mxu0 0
      %657 = vmatprep.mubr.bf16.mxu0 0
      %658 = vmatmul.mubr.bf16.gmra.mrb[0].mxu0 %v623
      %v659 = vpop.f32.mrb[0].mxu0
      %v660 = vadd.f32 %v547, %v659
      %v661 = vpop.f32.mrb[0].mxu0
      %v662 = vpop.f32.mrb[0].mxu0
      %v663 = vpop.f32.mrb[0].mxu0
      %664 = vdwg.mxu0
      %665 = vst.msk [vmem:[%s316 + $0x8] sm:$0xff] %vm481, %v660
      %v666 = vsel %vm579, %v521, 0
      %668 = vmatprep.subr.bf16.mxu0 0
      %669 = vmatpush1.bf16.msra.mxu0 %v569
      %670 = vmatprep.subr.bf16.mxu0 0
      %671 = vmatpush1.bf16.msra.mxu0 %v570
      %672 = vmatprep.subr.bf16.mxu0 0
      %673 = vmatpush1.bf16.msra.mxu0 %v571
      %674 = vmatprep.subr.bf16.mxu0 0
      %675 = vmatpush1.bf16.msra.mxu0 %v572
      %676 = vmatprep.subr.bf16.mxu0 0
      %677 = vmatpush1.bf16.msra.mxu0 %v573
      %678 = vmatprep.subr.bf16.mxu0 0
      %679 = vmatpush1.bf16.msra.mxu0 0
      %680 = vmatprep.subr.bf16.mxu0 0
      %681 = vmatpush1.bf16.msra.mxu0 0
      %682 = vmatprep.subr.bf16.mxu0 0
      %683 = vmatpush1.bf16.msra.mxu0 0
      %684 = vmatprep.subr.bf16.mxu0 0
      %685 = vmatpush1.bf16.msra.mxu0 0
      %686 = vmatprep.subr.bf16.mxu0 0
      %687 = vmatpush1.bf16.msra.mxu0 0
      %688 = vmatprep.subr.bf16.mxu0 0
      %689 = vmatpush1.bf16.msra.mxu0 0
      %690 = vmatprep.subr.bf16.mxu0 0
      %691 = vmatpush1.bf16.msra.mxu0 0
      %692 = vmatprep.subr.bf16.mxu0 0
      %693 = vmatpush1.bf16.msra.mxu0 0
      %694 = vmatprep.subr.bf16.mxu0 0
      %695 = vmatpush1.bf16.msra.mxu0 0
      %696 = vmatprep.subr.bf16.mxu0 0
      %697 = vmatpush1.bf16.msra.mxu0 0
      %698 = vmatprep.subr.bf16.mxu0 0
      %699 = vmatpush1.bf16.msra.mxu0 0
      %700 = vmatprep.mubr.bf16.mxu0 0
      %701 = vmatmul.mubr.bf16.gmra.mrb[0].mxu0 %v666
      %v702 = vpop.f32.mrb[0].mxu0
      %v703 = vadd.f32 %v547, %v702
      %v704 = vpop.f32.mrb[0].mxu0
      %v705 = vpop.f32.mrb[0].mxu0
      %v706 = vpop.f32.mrb[0].mxu0
      %707 = vdwg.mxu0
      %708 = vst.msk [vmem:[%s316 + $0x10] sm:$0xff] %vm481, %v703
      %v709 = vsel %vm579, %v523, 0
      %711 = vmatprep.subr.bf16.mxu0 0
      %712 = vmatpush1.bf16.msra.mxu0 %v569
      %713 = vmatprep.subr.bf16.mxu0 0
      %714 = vmatpush1.bf16.msra.mxu0 %v570
      %715 = vmatprep.subr.bf16.mxu0 0
      %716 = vmatpush1.bf16.msra.mxu0 %v571
      %717 = vmatprep.subr.bf16.mxu0 0
      %718 = vmatpush1.bf16.msra.mxu0 %v572
      %719 = vmatprep.subr.bf16.mxu0 0
      %720 = vmatpush1.bf16.msra.mxu0 %v573
      %721 = vmatprep.subr.bf16.mxu0 0
      %722 = vmatpush1.bf16.msra.mxu0 0
      %723 = vmatprep.subr.bf16.mxu0 0
      %724 = vmatpush1.bf16.msra.mxu0 0
      %725 = vmatprep.subr.bf16.mxu0 0
      %726 = vmatpush1.bf16.msra.mxu0 0
      %727 = vmatprep.subr.bf16.mxu0 0
      %728 = vmatpush1.bf16.msra.mxu0 0
      %729 = vmatprep.subr.bf16.mxu0 0
      %730 = vmatpush1.bf16.msra.mxu0 0
      %731 = vmatprep.subr.bf16.mxu0 0
      %732 = vmatpush1.bf16.msra.mxu0 0
      %733 = vmatprep.subr.bf16.mxu0 0
      %734 = vmatpush1.bf16.msra.mxu0 0
      %735 = vmatprep.subr.bf16.mxu0 0
      %736 = vmatpush1.bf16.msra.mxu0 0
      %737 = vmatprep.subr.bf16.mxu0 0
      %738 = vmatpush1.bf16.msra.mxu0 0
      %739 = vmatprep.subr.bf16.mxu0 0
      %740 = vmatpush1.bf16.msra.mxu0 0
      %741 = vmatprep.subr.bf16.mxu0 0
      %742 = vmatpush1.bf16.msra.mxu0 0
      %743 = vmatprep.mubr.bf16.mxu0 0
      %744 = vmatmul.mubr.bf16.gmra.mrb[0].mxu0 %v709
      %v745 = vpop.f32.mrb[0].mxu0
      %v746 = vadd.f32 %v547, %v745
      %v747 = vpop.f32.mrb[0].mxu0
      %v748 = vpop.f32.mrb[0].mxu0
      %v749 = vpop.f32.mrb[0].mxu0
      %750 = vdwg.mxu0
      %751 = vst.msk [vmem:[%s316 + $0x18] sm:$0xff] %vm481, %v746
      %v752 = vsel %vm579, %v525, 0
      %754 = vmatprep.subr.bf16.mxu0 0
      %755 = vmatpush1.bf16.msra.mxu0 %v569
      %756 = vmatprep.subr.bf16.mxu0 0
      %757 = vmatpush1.bf16.msra.mxu0 %v570
      %758 = vmatprep.subr.bf16.mxu0 0
      %759 = vmatpush1.bf16.msra.mxu0 %v571
      %760 = vmatprep.subr.bf16.mxu0 0
      %761 = vmatpush1.bf16.msra.mxu0 %v572
      %762 = vmatprep.subr.bf16.mxu0 0
      %763 = vmatpush1.bf16.msra.mxu0 %v573
      %764 = vmatprep.subr.bf16.mxu0 0
      %765 = vmatpush1.bf16.msra.mxu0 0
      %766 = vmatprep.subr.bf16.mxu0 0
      %767 = vmatpush1.bf16.msra.mxu0 0
      %768 = vmatprep.subr.bf16.mxu0 0
      %769 = vmatpush1.bf16.msra.mxu0 0
      %770 = vmatprep.subr.bf16.mxu0 0
      %771 = vmatpush1.bf16.msra.mxu0 0
      %772 = vmatprep.subr.bf16.mxu0 0
      %773 = vmatpush1.bf16.msra.mxu0 0
      %774 = vmatprep.subr.bf16.mxu0 0
      %775 = vmatpush1.bf16.msra.mxu0 0
      %776 = vmatprep.subr.bf16.mxu0 0
      %777 = vmatpush1.bf16.msra.mxu0 0
      %778 = vmatprep.subr.bf16.mxu0 0
      %779 = vmatpush1.bf16.msra.mxu0 0
      %780 = vmatprep.subr.bf16.mxu0 0
      %781 = vmatpush1.bf16.msra.mxu0 0
      %782 = vmatprep.subr.bf16.mxu0 0
      %783 = vmatpush1.bf16.msra.mxu0 0
      %784 = vmatprep.subr.bf16.mxu0 0
      %785 = vmatpush1.bf16.msra.mxu0 0
      %786 = vmatprep.mubr.bf16.mxu0 0
      %787 = vmatmul.mubr.bf16.gmra.mrb[0].mxu0 %v752
      %v788 = vpop.f32.mrb[0].mxu0
      %v789 = vadd.f32 %v547, %v788
      %v790 = vpop.f32.mrb[0].mxu0
      %v791 = vpop.f32.mrb[0].mxu0
      %v792 = vpop.f32.mrb[0].mxu0
      %793 = vdwg.mxu0
      %794 = vst.msk [vmem:[%s316 + $0x20] sm:$0xff] %vm481, %v789
      %v795 = vsel %vm579, %v527, 0
      %797 = vmatprep.subr.bf16.mxu0 0
      %798 = vmatpush1.bf16.msra.mxu0 %v569
      %799 = vmatprep.subr.bf16.mxu0 0
      %800 = vmatpush1.bf16.msra.mxu0 %v570
      %801 = vmatprep.subr.bf16.mxu0 0
      %802 = vmatpush1.bf16.msra.mxu0 %v571
      %803 = vmatprep.subr.bf16.mxu0 0
      %804 = vmatpush1.bf16.msra.mxu0 %v572
      %805 = vmatprep.subr.bf16.mxu0 0
      %806 = vmatpush1.bf16.msra.mxu0 %v573
      %807 = vmatprep.subr.bf16.mxu0 0
      %808 = vmatpush1.bf16.msra.mxu0 0
      %809 = vmatprep.subr.bf16.mxu0 0
      %810 = vmatpush1.bf16.msra.mxu0 0
      %811 = vmatprep.subr.bf16.mxu0 0
      %812 = vmatpush1.bf16.msra.mxu0 0
      %813 = vmatprep.subr.bf16.mxu0 0
      %814 = vmatpush1.bf16.msra.mxu0 0
      %815 = vmatprep.subr.bf16.mxu0 0
      %816 = vmatpush1.bf16.msra.mxu0 0
      %817 = vmatprep.subr.bf16.mxu0 0
      %818 = vmatpush1.bf16.msra.mxu0 0
      %819 = vmatprep.subr.bf16.mxu0 0
      %820 = vmatpush1.bf16.msra.mxu0 0
      %821 = vmatprep.subr.bf16.mxu0 0
      %822 = vmatpush1.bf16.msra.mxu0 0
      %823 = vmatprep.subr.bf16.mxu0 0
      %824 = vmatpush1.bf16.msra.mxu0 0
      %825 = vmatprep.subr.bf16.mxu0 0
      %826 = vmatpush1.bf16.msra.mxu0 0
      %827 = vmatprep.subr.bf16.mxu0 0
      %828 = vmatpush1.bf16.msra.mxu0 0
      %829 = vmatprep.mubr.bf16.mxu0 0
      %830 = vmatmul.mubr.bf16.gmra.mrb[0].mxu0 %v795
      %v831 = vpop.f32.mrb[0].mxu0
      %v832 = vadd.f32 %v547, %v831
      %v833 = vpop.f32.mrb[0].mxu0
      %v834 = vpop.f32.mrb[0].mxu0
      %v835 = vpop.f32.mrb[0].mxu0
      %836 = vdwg.mxu0
      %837 = vst.msk [vmem:[%s316 + $0x28] sm:$0xff] %vm481, %v832
      %v838 = vsel %vm579, %v529, 0
      %840 = vmatprep.subr.bf16.mxu0 0
      %841 = vmatpush1.bf16.msra.mxu0 %v569
      %842 = vmatprep.subr.bf16.mxu0 0
      %843 = vmatpush1.bf16.msra.mxu0 %v570
      %844 = vmatprep.subr.bf16.mxu0 0
      %845 = vmatpush1.bf16.msra.mxu0 %v571
      %846 = vmatprep.subr.bf16.mxu0 0
      %847 = vmatpush1.bf16.msra.mxu0 %v572
      %848 = vmatprep.subr.bf16.mxu0 0
      %849 = vmatpush1.bf16.msra.mxu0 %v573
      %850 = vmatprep.subr.bf16.mxu0 0
      %851 = vmatpush1.bf16.msra.mxu0 0
      %852 = vmatprep.subr.bf16.mxu0 0
      %853 = vmatpush1.bf16.msra.mxu0 0
      %854 = vmatprep.subr.bf16.mxu0 0
      %855 = vmatpush1.bf16.msra.mxu0 0
      %856 = vmatprep.subr.bf16.mxu0 0
      %857 = vmatpush1.bf16.msra.mxu0 0
      %858 = vmatprep.subr.bf16.mxu0 0
      %859 = vmatpush1.bf16.msra.mxu0 0
      %860 = vmatprep.subr.bf16.mxu0 0
      %861 = vmatpush1.bf16.msra.mxu0 0
      %862 = vmatprep.subr.bf16.mxu0 0
      %863 = vmatpush1.bf16.msra.mxu0 0
      %864 = vmatprep.subr.bf16.mxu0 0
      %865 = vmatpush1.bf16.msra.mxu0 0
      %866 = vmatprep.subr.bf16.mxu0 0
      %867 = vmatpush1.bf16.msra.mxu0 0
      %868 = vmatprep.subr.bf16.mxu0 0
      %869 = vmatpush1.bf16.msra.mxu0 0
      %870 = vmatprep.subr.bf16.mxu0 0
      %871 = vmatpush1.bf16.msra.mxu0 0
      %872 = vmatprep.mubr.bf16.mxu0 0
      %873 = vmatmul.mubr.bf16.gmra.mrb[0].mxu0 %v838
      %v874 = vpop.f32.mrb[0].mxu0
      %v875 = vadd.f32 %v547, %v874
      %v876 = vpop.f32.mrb[0].mxu0
      %v877 = vpop.f32.mrb[0].mxu0
      %v878 = vpop.f32.mrb[0].mxu0
      %879 = vdwg.mxu0
      %880 = vst.msk [vmem:[%s316 + $0x30] sm:$0xff] %vm481, %v875
      %v881 = vsel %vm579, %v531, 0
      %883 = vmatprep.subr.bf16.mxu0 0
      %884 = vmatpush1.bf16.msra.mxu0 %v569
      %885 = vmatprep.subr.bf16.mxu0 0
      %886 = vmatpush1.bf16.msra.mxu0 %v570
      %887 = vmatprep.subr.bf16.mxu0 0
      %888 = vmatpush1.bf16.msra.mxu0 %v571
      %889 = vmatprep.subr.bf16.mxu0 0
      %890 = vmatpush1.bf16.msra.mxu0 %v572
      %891 = vmatprep.subr.bf16.mxu0 0
      %892 = vmatpush1.bf16.msra.mxu0 %v573
      %893 = vmatprep.subr.bf16.mxu0 0
      %894 = vmatpush1.bf16.msra.mxu0 0
      %895 = vmatprep.subr.bf16.mxu0 0
      %896 = vmatpush1.bf16.msra.mxu0 0
      %897 = vmatprep.subr.bf16.mxu0 0
      %898 = vmatpush1.bf16.msra.mxu0 0
      %899 = vmatprep.subr.bf16.mxu0 0
      %900 = vmatpush1.bf16.msra.mxu0 0
      %901 = vmatprep.subr.bf16.mxu0 0
      %902 = vmatpush1.bf16.msra.mxu0 0
      %903 = vmatprep.subr.bf16.mxu0 0
      %904 = vmatpush1.bf16.msra.mxu0 0
      %905 = vmatprep.subr.bf16.mxu0 0
      %906 = vmatpush1.bf16.msra.mxu0 0
      %907 = vmatprep.subr.bf16.mxu0 0
      %908 = vmatpush1.bf16.msra.mxu0 0
      %909 = vmatprep.subr.bf16.mxu0 0
      %910 = vmatpush1.bf16.msra.mxu0 0
      %911 = vmatprep.subr.bf16.mxu0 0
      %912 = vmatpush1.bf16.msra.mxu0 0
      %913 = vmatprep.subr.bf16.mxu0 0
      %914 = vmatpush1.bf16.msra.mxu0 0
      %915 = vmatprep.mubr.bf16.mxu0 0
      %916 = vmatmul.mubr.bf16.gmra.mrb[0].mxu0 %v881
      %v917 = vpop.f32.mrb[0].mxu0
      %v918 = vadd.f32 %v547, %v917
      %v919 = vpop.f32.mrb[0].mxu0
      %v920 = vpop.f32.mrb[0].mxu0
      %v921 = vpop.f32.mrb[0].mxu0
      %922 = vdwg.mxu0
      %923 = vst.msk [vmem:[%s316 + $0x38] sm:$0xff] %vm481, %v918
      %s924 = smul.u32 8, %s20
      %p925 = scmp.lt.s32.totalorder %s19, 1
      %s926 = scalar_select %p925, %s19, 1
      %p927 = scmp.lt.s32.totalorder %s924, 7
      %s928 = scalar_select %p927, %s924, 7
      %s929 = smul.addr %s926, 8
      %s930 = sadd.s32 %s928, %s929
      %s931 = smul.addr %s930, 8
      %s932 = scalar_lea.vmem %s4, %s931
      // Predicated region
      $region37: #{patch_embed_forward.1} parent=35 // pred_check
        %p933 = pneg %p149
      $region38: #{patch_embed_forward.1} parent=35 // pred_check_branch
        %935 = sbr.rel (%p933) target = $region40
      $region39: #{patch_embed_forward.1} parent=35 // pred_region
        %s936 = smul.u32 8, %s20
      $region40: #{patch_embed_forward.1} parent=35 // pred_fallthru
        _
    $region36: #{patch_embed_forward.1} parent=5 // pred_fallthru
      _
    %p937 = scmp.le.s32.totalorder 2, %s10
    // Predicated region
    $region41: #{patch_embed_forward.1} parent=5 // pred_check
      %p938 = pneg %p937
    $region42: #{patch_embed_forward.1} parent=5 // pred_check_branch
      %940 = sbr.rel (%p938) target = $region44
    $region43: #{patch_embed_forward.1} parent=5 // pred_region
      %s941 = ssub.s32 %s10, 2
      // Predicated region
      $region45: #{patch_embed_forward.1} parent=43 // pred_check
        %p942 = pneg %p155
      $region46: #{patch_embed_forward.1} parent=43 // pred_check_branch
        %944 = sbr.rel (%p942) target = $region48
      $region47: #{patch_embed_forward.1} parent=43 // pred_region
        %s945 = smul.u32 8, %s22
        %p946 = scmp.lt.s32.totalorder %s21, 1
        %s947 = scalar_select %p946, %s21, 1
        %p948 = scmp.lt.s32.totalorder %s945, 7
        %s949 = scalar_select %p948, %s945, 7
        %s950 = smul.addr %s947, 8
        %s951 = sadd.s32 %s949, %s950
        %s952 = smul.addr %s951, 8
        %s953 = scalar_lea.vmem %s4, %s952
      $region48: #{patch_embed_forward.1} parent=43 // pred_fallthru
        _
    $region44: #{patch_embed_forward.1} parent=5 // pred_fallthru
      _
  $region6: #{patch_embed_forward.1} parent=0 // loop_footer
    %s14 = sadd.s32 1, %s10
  $region7: #{patch_embed_forward.1} parent=0 // loop_footer_branch
    %9 = sbr.rel target = $region3
  $region8: #{patch_embed_forward.1} parent=0 // loop_exit
    _

</llo_original>
